<compile_context>
chip_gen: v6e
topology: v6e:2x2x1
jax: 0.10.0
libtpu: 0.0.40
codegen_flags: <defaults>
</compile_context>

<pallas_src>
import jax
import jax.numpy as jnp
from jax import lax
from jax.experimental import pallas as pl
from jax.experimental.pallas import tpu as pltpu


def _round_up(n, m):
    return ((n + m - 1) // m) * m


def mlp_kernel(x_ref, w1_ref, b1_ref, w2_ref, b2_ref, w3_ref, b3_ref, o_ref):
    # x_ref: (tile_b, in_features) f32 ; w1_ref: (h1p, in_features) f32
    x = x_ref[...]
    # Contract both operands on their minor (in_features) dim so the result
    # lands as (h1p, tile_b): batch on the 128-wide lane axis from here on.
    h1 = jnp.tanh(
        lax.dot_general(
            w1_ref[...], x,
            dimension_numbers=(((1,), (1,)), ((), ())),
            preferred_element_type=jnp.float32,
        )
        + b1_ref[...]
    )                                                    # (h1p, tile_b) f32
    # dropout(p=0.1) -> identity in eval mode
    h2 = jnp.tanh(
        jnp.dot(w2_ref[...], h1, preferred_element_type=jnp.float32)
        + b2_ref[...]
    )                                                    # (h2p, tile_b) f32
    # dropout(p=0.1) -> identity in eval mode
    # layer 3 (fan_out = 1): VPU multiply + sublane reduce -> lane-dense row
    logits = jnp.sum(h2 * w3_ref[...], axis=0, keepdims=True) + b3_ref[...]
    o_ref[...] = jnp.maximum(logits, 0.0).astype(o_ref.dtype)   # (1, tile_b)


def prepare_params(w1, b1, w2, b2, w3, b3):
    """One-time layout prep (hoisted out of the per-call path).

    Weights stored PyTorch-math style as (fan_in, fan_out), biases (1, fan_out).
    Returns transposed (fan_out, fan_in) weights and column biases, with hidden
    dims zero-padded to sublane granularity (8). Zero padding is exact:
    tanh(0) = 0 and the padded w3 rows are zero.
    """
    in_features, num_nodes = w1.shape
    hidden2 = w2.shape[1]
    h1p = _round_up(num_nodes, 8)
    h2p = _round_up(hidden2, 8)

    def pad_to(a, shape):
        return jnp.pad(a, [(0, t - s) for s, t in zip(a.shape, shape)])

    w1t = pad_to(w1, (in_features, h1p)).T.astype(jnp.float32)   # (h1p, in_f)
    b1c = pad_to(b1, (1, h1p)).T.astype(jnp.float32)             # (h1p, 1)
    w2t = pad_to(w2, (h1p, h2p)).T.astype(jnp.float32)           # (h2p, h1p)
    b2c = pad_to(b2, (1, h2p)).T.astype(jnp.float32)             # (h2p, 1)
    w3c = pad_to(w3, (h2p, 1)).astype(jnp.float32)               # (h2p, 1)
    b3c = b3.astype(jnp.float32)                                 # (1, 1)
    return w1t, b1c, w2t, b2c, w3c, b3c


@jax.jit
def neural_network_forward(x, w1t, b1c, w2t, b2c, w3c, b3c):
    """x: (B, in_features) f32; prepared params from prepare_params()."""
    B, in_features = x.shape
    h1p, _ = w1t.shape
    h2p, _ = w2t.shape
    num_nodes = h1p
    hidden2 = h2p

    # Lane-axis (batch) tile selection:
    #  * small B: one lane-aligned step (multiple of 128 -> unmasked vregs/vst)
    #  * mid B:   two steps so v7x's second TensorCore gets work
    #  * large B: 2048-wide lane tiles to amortize per-step overhead
    if B <= 256:
        tile_b = _round_up(B, 128)
    elif B <= 4096:
        tile_b = _round_up((B + 1) // 2, 128)
    else:
        tile_b = 2048
    b_pad = _round_up(B, tile_b)

    xp = x.astype(jnp.float32)
    if b_pad != B:
        xp = jnp.pad(xp, ((0, b_pad - B), (0, 0)))

    grid = (b_pad // tile_b,)

    cost = pl.CostEstimate(
        flops=2 * b_pad * (in_features * num_nodes + num_nodes * hidden2 + hidden2),
        transcendentals=b_pad * (num_nodes + hidden2),
        bytes_accessed=(xp.size + w1t.size + b1c.size + w2t.size + b2c.size
                        + w3c.size + 1 + b_pad) * 4,
    )

    in_specs = [
        pl.BlockSpec((tile_b, in_features), lambda i: (i, 0)),
        # weights/biases: constant index_map -> resident, no re-DMA per step
        pl.BlockSpec((h1p, in_features), lambda i: (0, 0)),
        pl.BlockSpec((h1p, 1), lambda i: (0, 0)),
        pl.BlockSpec((h2p, h1p), lambda i: (0, 0)),
        pl.BlockSpec((h2p, 1), lambda i: (0, 0)),
        pl.BlockSpec((h2p, 1), lambda i: (0, 0)),
        pl.BlockSpec((1, 1), lambda i: (0, 0)),
    ]
    out_specs = pl.BlockSpec((1, tile_b), lambda i: (0, i))

    out = pl.pallas_call(
        mlp_kernel,
        out_shape=jax.ShapeDtypeStruct((1, b_pad), jnp.float32),
        grid_spec=pltpu.PrefetchScalarGridSpec(
            num_scalar_prefetch=0,
            grid=grid,
            in_specs=in_specs,
            out_specs=out_specs,
        ),
        compiler_params=pltpu.CompilerParams(
            dimension_semantics=("parallel",),
            # actual usage is ~1-2 MiB even at tile_b=2048; explicit budget is
            # well under v7x's 64 MiB physical VMEM (128 MiB on v5e/v6e)
            vmem_limit_bytes=32 * 1024 * 1024,
        ),
        cost_estimate=cost,
    )(xp, w1t, b1c, w2t, b2c, w3c, b3c)

    return out[0, :B].reshape(B, 1)


def init_params(key, in_features, num_nodes):
    """PyTorch nn.Linear-style init U[-1/sqrt(fan_in), 1/sqrt(fan_in)];
    weights stored (fan_in, fan_out), biases (1, fan_out)."""
    def linear(key, fan_in, fan_out):
        kw, kb = jax.random.split(key)
        bound = 1.0 / jnp.sqrt(fan_in)
        w = jax.random.uniform(kw, (fan_in, fan_out), jnp.float32, -bound, bound)
        b = jax.random.uniform(kb, (1, fan_out), jnp.float32, -bound, bound)
        return w, b

    k1, k2, k3 = jax.random.split(key, 3)
    w1, b1 = linear(k1, in_features, num_nodes)
    w2, b2 = linear(k2, num_nodes, 100)
    w3, b3 = linear(k3, 100, 1)
    return w1, b1, w2, b2, w3, b3


def reference_forward(x, w1, b1, w2, b2, w3, b3):
    h1 = jnp.tanh(x @ w1 + b1)
    h2 = jnp.tanh(h1 @ w2 + b2)
    return jnp.maximum(h2 @ w3 + b3, 0.0)


if __name__ == "__main__":
    key = jax.random.PRNGKey(0)
    k_params, k_x = jax.random.split(key)

    batch = 16
    in_features = 32
    num_nodes = 64

    params = init_params(k_params, in_features, num_nodes)
    x = jax.random.normal(k_x, (batch, in_features), dtype=jnp.float32)

    prepared = prepare_params(*params)
    out = neural_network_forward(x, *prepared)
    out = jax.block_until_ready(out)

    ref = reference_forward(x, *params)
    assert out.shape == (batch, 1)
    # relaxed tolerance: TPU default matmul precision routes f32 dots through
    # bf16 MXU passes
    assert jnp.allclose(out, ref, atol=2e-2, rtol=2e-2), "mismatch vs reference"

    print("KERNEL_OK")
</pallas_src>

<mosaic_0001>
module attributes {stable_mosaic.version = 11 : i64} {
  func.func @mlp_kernel(%arg0: i32, %arg1: memref<128x32xf32, #tpu.memory_space<vmem>>, %arg2: memref<64x32xf32, #tpu.memory_space<vmem>>, %arg3: memref<64x1xf32, #tpu.memory_space<vmem>>, %arg4: memref<104x64xf32, #tpu.memory_space<vmem>>, %arg5: memref<104x1xf32, #tpu.memory_space<vmem>>, %arg6: memref<104x1xf32, #tpu.memory_space<vmem>>, %arg7: memref<1x1xf32, #tpu.memory_space<vmem>>, %arg8: memref<1x128xf32, #tpu.memory_space<vmem>>) attributes {dimension_semantics = [#tpu.dimension_semantics<parallel>], iteration_bounds = array<i64: 1>, scalar_prefetch = 0 : i64, scratch_operands = 0 : i64, tpu.core_type = #tpu.core_type<tc>, window_params = [{transform_indices = @transform_0, window_bounds = array<i64: 128, 32>}, {pipeline_mode = #tpu.pipeline_mode<synchronous>, transform_indices = @transform_1, window_bounds = array<i64: 64, 32>}, {pipeline_mode = #tpu.pipeline_mode<synchronous>, transform_indices = @transform_2, window_bounds = array<i64: 64, 1>}, {pipeline_mode = #tpu.pipeline_mode<synchronous>, transform_indices = @transform_3, window_bounds = array<i64: 104, 64>}, {pipeline_mode = #tpu.pipeline_mode<synchronous>, transform_indices = @transform_4, window_bounds = array<i64: 104, 1>}, {pipeline_mode = #tpu.pipeline_mode<synchronous>, transform_indices = @transform_5, window_bounds = array<i64: 104, 1>}, {pipeline_mode = #tpu.pipeline_mode<synchronous>, transform_indices = @transform_6, window_bounds = array<i64: 1, 1>}, {transform_indices = @transform_7, window_bounds = array<i64: 1, 128>}]} {
    %c0 = arith.constant 0 : index
    %c0_0 = arith.constant 0 : index
    %0 = vector.load %arg1[%c0, %c0_0] : memref<128x32xf32, #tpu.memory_space<vmem>>, vector<128x32xf32>
    %c0_1 = arith.constant 0 : index
    %c0_2 = arith.constant 0 : index
    %1 = vector.load %arg2[%c0_1, %c0_2] : memref<64x32xf32, #tpu.memory_space<vmem>>, vector<64x32xf32>
    %cst = arith.constant dense<0.000000e+00> : vector<64x128xf32>
    %2 = tpu.matmul %1, %0, %cst {dimension_numbers = #tpu.dot_dimension_numbers<[1], [1], [0], [0], [0, 0, 1, 0], [], []>} : vector<64x32xf32>, vector<128x32xf32>, vector<64x128xf32> -> vector<64x128xf32>
    %c0_3 = arith.constant 0 : index
    %c0_4 = arith.constant 0 : index
    %3 = vector.load %arg3[%c0_3, %c0_4] : memref<64x1xf32, #tpu.memory_space<vmem>>, vector<64x1xf32>
    %4 = vector.broadcast %3 : vector<64x1xf32> to vector<64x128xf32>
    %5 = arith.addf %2, %4 : vector<64x128xf32>
    %6 = math.tanh %5 : vector<64x128xf32>
    %c0_5 = arith.constant 0 : index
    %c0_6 = arith.constant 0 : index
    %7 = vector.load %arg4[%c0_5, %c0_6] : memref<104x64xf32, #tpu.memory_space<vmem>>, vector<104x64xf32>
    %cst_7 = arith.constant dense<0.000000e+00> : vector<104x128xf32>
    %8 = tpu.matmul %7, %6, %cst_7 {dimension_numbers = #tpu.dot_dimension_numbers<[1], [0], [0], [1], [0, 0, 1, 1], [], []>} : vector<104x64xf32>, vector<64x128xf32>, vector<104x128xf32> -> vector<104x128xf32>
    %c0_8 = arith.constant 0 : index
    %c0_9 = arith.constant 0 : index
    %9 = vector.load %arg5[%c0_8, %c0_9] : memref<104x1xf32, #tpu.memory_space<vmem>>, vector<104x1xf32>
    %10 = vector.broadcast %9 : vector<104x1xf32> to vector<104x128xf32>
    %11 = arith.addf %8, %10 : vector<104x128xf32>
    %12 = math.tanh %11 : vector<104x128xf32>
    %c0_10 = arith.constant 0 : index
    %c0_11 = arith.constant 0 : index
    %13 = vector.load %arg6[%c0_10, %c0_11] : memref<104x1xf32, #tpu.memory_space<vmem>>, vector<104x1xf32>
    %14 = vector.broadcast %13 : vector<104x1xf32> to vector<104x128xf32>
    %15 = arith.mulf %12, %14 : vector<104x128xf32>
    %cst_12 = arith.constant dense<0.000000e+00> : vector<128xf32>
    %16 = vector.multi_reduction <add>, %15, %cst_12 [0] : vector<104x128xf32> to vector<128xf32>
    %17 = vector.shape_cast %16 : vector<128xf32> to vector<1x128xf32>
    %c0_13 = arith.constant 0 : index
    %c0_14 = arith.constant 0 : index
    %18 = vector.load %arg7[%c0_13, %c0_14] : memref<1x1xf32, #tpu.memory_space<vmem>>, vector<1x1xf32>
    %19 = vector.broadcast %18 : vector<1x1xf32> to vector<1x128xf32>
    %20 = arith.addf %17, %19 : vector<1x128xf32>
    %cst_15 = arith.constant 0.000000e+00 : f32
    %21 = vector.broadcast %cst_15 : f32 to vector<1x128xf32>
    %22 = arith.maximumf %20, %21 : vector<1x128xf32>
    %c0_16 = arith.constant 0 : index
    %c0_17 = arith.constant 0 : index
    %23 = vector.load %arg8[%c0_16, %c0_17] : memref<1x128xf32, #tpu.memory_space<vmem>>, vector<1x128xf32>
    tpu.vector_store %arg8[%c0_16, %c0_17], %22 {strides = array<i32>} : memref<1x128xf32, #tpu.memory_space<vmem>>, vector<1x128xf32>,
    return
  }
  func.func @transform_0(%arg0: i32) -> (i32, i32) {
    %c0_i32 = arith.constant 0 : i32
    %c0_i32_0 = arith.constant 0 : i32
    return %arg0, %c0_i32 : i32, i32
  }
  func.func @transform_1(%arg0: i32) -> (i32, i32) {
    %c0_i32 = arith.constant 0 : i32
    %c0_i32_0 = arith.constant 0 : i32
    %c0_i32_1 = arith.constant 0 : i32
    return %c0_i32, %c0_i32_0 : i32, i32
  }
  func.func @transform_2(%arg0: i32) -> (i32, i32) {
    %c0_i32 = arith.constant 0 : i32
    %c0_i32_0 = arith.constant 0 : i32
    %c0_i32_1 = arith.constant 0 : i32
    return %c0_i32, %c0_i32_0 : i32, i32
  }
  func.func @transform_3(%arg0: i32) -> (i32, i32) {
    %c0_i32 = arith.constant 0 : i32
    %c0_i32_0 = arith.constant 0 : i32
    %c0_i32_1 = arith.constant 0 : i32
    return %c0_i32, %c0_i32_0 : i32, i32
  }
  func.func @transform_4(%arg0: i32) -> (i32, i32) {
    %c0_i32 = arith.constant 0 : i32
    %c0_i32_0 = arith.constant 0 : i32
    %c0_i32_1 = arith.constant 0 : i32
    return %c0_i32, %c0_i32_0 : i32, i32
  }
  func.func @transform_5(%arg0: i32) -> (i32, i32) {
    %c0_i32 = arith.constant 0 : i32
    %c0_i32_0 = arith.constant 0 : i32
    %c0_i32_1 = arith.constant 0 : i32
    return %c0_i32, %c0_i32_0 : i32, i32
  }
  func.func @transform_6(%arg0: i32) -> (i32, i32) {
    %c0_i32 = arith.constant 0 : i32
    %c0_i32_0 = arith.constant 0 : i32
    %c0_i32_1 = arith.constant 0 : i32
    return %c0_i32, %c0_i32_0 : i32, i32
  }
  func.func @transform_7(%arg0: i32) -> (i32, i32) {
    %c0_i32 = arith.constant 0 : i32
    %c0_i32_0 = arith.constant 0 : i32
    return %c0_i32, %arg0 : i32, i32
  }
}

</mosaic_0001>

<llo_original>
// kernel: neural_network_forward.1
$region0: #{neural_network_forward.1}
  #allocation0 [shape = 'u32[]', space=smem, size = 0x4, offset = 0x4, fixed_abs, tag = 'smem constant byte address 0x4 - core index']
  #allocation1 [shape = 'u32[144,128]{1,0:T(1,128)}', space=vmem, size = 0x12000, scoped, tag = 'internal scratch']
  #allocation2 [shape = 'f32[1,1]{1,0:T(1,128)S(1)}', space=vmem, size = 0x200, scoped, tag = 'scoped memory for neural_network_forward.1']
  %s0 = inlined_call_operand.vmem [shape: f32[128,32], index: 0, kind: input, shape index: {}]
  %s1 = inlined_call_operand.vmem [shape: f32[64,32], index: 1, kind: input, shape index: {}]
  %s2 = inlined_call_operand.vmem [shape: f32[64,1], index: 2, kind: input, shape index: {}]
  %s3 = inlined_call_operand.vmem [shape: f32[104,64], index: 3, kind: input, shape index: {}]
  %s4 = inlined_call_operand.vmem [shape: f32[104,1], index: 4, kind: input, shape index: {}]
  %s5 = inlined_call_operand.vmem [shape: f32[104,1], index: 5, kind: input, shape index: {}]
  %s6 = inlined_call_operand.<no memory space> [shape: f32[1,1], index: 6, kind: input, shape index: {}]
  %s7 = inlined_call_operand.vmem [shape: f32[1,128], index: 7, kind: output, shape index: {}]
  %s8 = sld [smem:[#allocation0]]
  $region38: #{neural_network_forward.1} parent=0
    _
  %s10 = ssub.s32 1, %s8
  %s11 = scalar_select 0, %s10, %s8
  %v12 = vstv %s6
  %13 = vst [vmem:[#allocation2] sm:$0x1] %v12
  // Predicated region
  $region2: #{neural_network_forward.1} parent=0 // pred_check
    _
  $region3: #{neural_network_forward.1} parent=0 // pred_check_branch
    %15 = sbr.rel (0) target = $region5
  $region4: #{neural_network_forward.1} parent=0 // pred_region
    _
  $region5: #{neural_network_forward.1} parent=0 // pred_fallthru
    _
  // Predicated region
  $region6: #{neural_network_forward.1} parent=0 // pred_check
    _
  $region7: #{neural_network_forward.1} parent=0 // pred_check_branch
    %17 = sbr.rel (0) target = $region9
  $region8: #{neural_network_forward.1} parent=0 // pred_region
    _
  $region9: #{neural_network_forward.1} parent=0 // pred_fallthru
    _
  // Predicated region
  $region10: #{neural_network_forward.1} parent=0 // pred_check
    _
  $region11: #{neural_network_forward.1} parent=0 // pred_check_branch
    %19 = sbr.rel (0) target = $region13
  $region12: #{neural_network_forward.1} parent=0 // pred_region
    _
  $region13: #{neural_network_forward.1} parent=0 // pred_fallthru
    _
  // Predicated region
  $region14: #{neural_network_forward.1} parent=0 // pred_check
    _
  $region15: #{neural_network_forward.1} parent=0 // pred_check_branch
    %21 = sbr.rel (0) target = $region17
  $region16: #{neural_network_forward.1} parent=0 // pred_region
    _
  $region17: #{neural_network_forward.1} parent=0 // pred_fallthru
    _
  // Predicated region
  $region18: #{neural_network_forward.1} parent=0 // pred_check
    _
  $region19: #{neural_network_forward.1} parent=0 // pred_check_branch
    %23 = sbr.rel (0) target = $region21
  $region20: #{neural_network_forward.1} parent=0 // pred_region
    _
  $region21: #{neural_network_forward.1} parent=0 // pred_fallthru
    _
  // Predicated region
  $region22: #{neural_network_forward.1} parent=0 // pred_check
    _
  $region23: #{neural_network_forward.1} parent=0 // pred_check_branch
    %25 = sbr.rel (0) target = $region25
  $region24: #{neural_network_forward.1} parent=0 // pred_region
    _
  $region25: #{neural_network_forward.1} parent=0 // pred_fallthru
    _
  // Predicated region
  $region26: #{neural_network_forward.1} parent=0 // pred_check
    _
  $region27: #{neural_network_forward.1} parent=0 // pred_check_branch
    %27 = sbr.rel (0) target = $region29
  $region28: #{neural_network_forward.1} parent=0 // pred_region
    _
  $region29: #{neural_network_forward.1} parent=0 // pred_fallthru
    _
  %v28 = vld [vmem:[%s0] sm:$0xff]
  %v29 = vld [vmem:[%s0 + $0x8] sm:$0xff]
  %v30 = vld [vmem:[%s0 + $0x10] sm:$0xff]
  %v31 = vld [vmem:[%s0 + $0x18] sm:$0xff]
  %v32 = vld [vmem:[%s0 + $0x20] sm:$0xff]
  %v33 = vld [vmem:[%s0 + $0x28] sm:$0xff]
  %v34 = vld [vmem:[%s0 + $0x30] sm:$0xff]
  %v35 = vld [vmem:[%s0 + $0x38] sm:$0xff]
  %v36 = vld [vmem:[%s0 + $0x40] sm:$0xff]
  %v37 = vld [vmem:[%s0 + $0x48] sm:$0xff]
  %v38 = vld [vmem:[%s0 + $0x50] sm:$0xff]
  %v39 = vld [vmem:[%s0 + $0x58] sm:$0xff]
  %v40 = vld [vmem:[%s0 + $0x60] sm:$0xff]
  %v41 = vld [vmem:[%s0 + $0x68] sm:$0xff]
  %v42 = vld [vmem:[%s0 + $0x70] sm:$0xff]
  %v43 = vld [vmem:[%s0 + $0x78] sm:$0xff]
  %v44 = vld [vmem:[%s1] sm:$0xff]
  %v45 = vld [vmem:[%s1 + $0x8] sm:$0xff]
  %v46 = vld [vmem:[%s1 + $0x10] sm:$0xff]
  %v47 = vld [vmem:[%s1 + $0x18] sm:$0xff]
  %v48 = vld [vmem:[%s1 + $0x20] sm:$0xff]
  %v49 = vld [vmem:[%s1 + $0x28] sm:$0xff]
  %v50 = vld [vmem:[%s1 + $0x30] sm:$0xff]
  %v51 = vld [vmem:[%s1 + $0x38] sm:$0xff]
  %v52 = vld [vmem:[%s2] sm:$0xff]
  %v53 = vld [vmem:[%s2 + $0x8] sm:$0xff]
  %v54 = vld [vmem:[%s2 + $0x10] sm:$0xff]
  %v55 = vld [vmem:[%s2 + $0x18] sm:$0xff]
  %v56 = vld [vmem:[%s2 + $0x20] sm:$0xff]
  %v57 = vld [vmem:[%s2 + $0x28] sm:$0xff]
  %v58 = vld [vmem:[%s2 + $0x30] sm:$0xff]
  %v59 = vld [vmem:[%s2 + $0x38] sm:$0xff]
  %61 = vset.pattern.permute.xlu0 0
  %62 = vperm.xlu0 %61, %v52
  %v63 = vpop.permute.xlu0 %62
  %66 = vset.pattern.permute.xlu0 0
  %67 = vperm.xlu0 %66, %v53
  %v68 = vpop.permute.xlu0 %67
  %71 = vset.pattern.permute.xlu0 0
  %72 = vperm.xlu0 %71, %v54
  %v73 = vpop.permute.xlu0 %72
  %76 = vset.pattern.permute.xlu0 0
  %77 = vperm.xlu0 %76, %v55
  %v78 = vpop.permute.xlu0 %77
  %81 = vset.pattern.permute.xlu0 0
  %82 = vperm.xlu0 %81, %v56
  %v83 = vpop.permute.xlu0 %82
  %86 = vset.pattern.permute.xlu0 0
  %87 = vperm.xlu0 %86, %v57
  %v88 = vpop.permute.xlu0 %87
  %91 = vset.pattern.permute.xlu0 0
  %92 = vperm.xlu0 %91, %v58
  %v93 = vpop.permute.xlu0 %92
  %96 = vset.pattern.permute.xlu0 0
  %97 = vperm.xlu0 %96, %v59
  %v98 = vpop.permute.xlu0 %97
  %vm100 = vcmask 261120
  %v102 = vsel %vm100, %v44, 0
  %v105 = vsel %vm100, %v45, 0
  %v108 = vsel %vm100, %v46, 0
  %v111 = vsel %vm100, %v47, 0
  %v114 = vsel %vm100, %v48, 0
  %v117 = vsel %vm100, %v49, 0
  %v120 = vsel %vm100, %v50, 0
  %v123 = vsel %vm100, %v51, 0
  %v126 = vsel %vm100, %v28, 0
  %v129 = vsel %vm100, %v29, 0
  %v132 = vsel %vm100, %v30, 0
  %v135 = vsel %vm100, %v31, 0
  %v138 = vsel %vm100, %v32, 0
  %v141 = vsel %vm100, %v33, 0
  %v144 = vsel %vm100, %v34, 0
  %v147 = vsel %vm100, %v35, 0
  %v150 = vsel %vm100, %v36, 0
  %v153 = vsel %vm100, %v37, 0
  %v156 = vsel %vm100, %v38, 0
  %v159 = vsel %vm100, %v39, 0
  %v162 = vsel %vm100, %v40, 0
  %v165 = vsel %vm100, %v41, 0
  %v168 = vsel %vm100, %v42, 0
  %v171 = vsel %vm100, %v43, 0
  %173 = vmatprep.subr.mxu0 0.0
  %174 = vmatpush1.xpose.msra.mxu0 %v171
  %175 = vmatprep.subr.mxu0 0.0
  %176 = vmatpush1.xpose.msra.mxu0 %v168
  %177 = vmatprep.subr.mxu0 0.0
  %178 = vmatpush1.xpose.msra.mxu0 %v165
  %179 = vmatprep.subr.mxu0 0.0
  %180 = vmatpush1.xpose.msra.mxu0 %v162
  %181 = vmatprep.subr.mxu0 0.0
  %182 = vmatpush1.xpose.msra.mxu0 %v159
  %183 = vmatprep.subr.mxu0 0.0
  %184 = vmatpush1.xpose.msra.mxu0 %v156
  %185 = vmatprep.subr.mxu0 0.0
  %186 = vmatpush1.xpose.msra.mxu0 %v153
  %187 = vmatprep.subr.mxu0 0.0
  %188 = vmatpush1.xpose.msra.mxu0 %v150
  %189 = vmatprep.subr.mxu0 0.0
  %190 = vmatpush1.xpose.msra.mxu0 %v147
  %191 = vmatprep.subr.mxu0 0.0
  %192 = vmatpush1.xpose.msra.mxu0 %v144
  %193 = vmatprep.subr.mxu0 0.0
  %194 = vmatpush1.xpose.msra.mxu0 %v141
  %195 = vmatprep.subr.mxu0 0.0
  %196 = vmatpush1.xpose.msra.mxu0 %v138
  %197 = vmatprep.subr.mxu0 0.0
  %198 = vmatpush1.xpose.msra.mxu0 %v135
  %199 = vmatprep.subr.mxu0 0.0
  %200 = vmatpush1.xpose.msra.mxu0 %v132
  %201 = vmatprep.subr.mxu0 0.0
  %202 = vmatpush1.xpose.msra.mxu0 %v129
  %203 = vmatprep.subr.mxu0 0.0
  %204 = vmatpush1.xpose.msra.mxu0 %v126
  %205 = vmatprep.subr.mxu0 0.0
  %206 = vmatpush2.xpose.msra.mxu0 0.0
  %207 = vmatprep.subr.mxu0 0.0
  %208 = vmatpush2.xpose.msra.mxu0 0.0
  %209 = vmatprep.subr.mxu0 0.0
  %210 = vmatpush2.xpose.msra.mxu0 0.0
  %211 = vmatprep.subr.mxu0 0.0
  %212 = vmatpush2.xpose.msra.mxu0 0.0
  %213 = vmatprep.subr.mxu0 0.0
  %214 = vmatpush2.xpose.msra.mxu0 0.0
  %215 = vmatprep.subr.mxu0 0.0
  %216 = vmatpush2.xpose.msra.mxu0 0.0
  %217 = vmatprep.subr.mxu0 0.0
  %218 = vmatpush2.xpose.msra.mxu0 0.0
  %219 = vmatprep.subr.mxu0 0.0
  %220 = vmatpush2.xpose.msra.mxu0 0.0
  %221 = vmatprep.subr.mxu0 0.0
  %222 = vmatpush2.xpose.msra.mxu0 0.0
  %223 = vmatprep.subr.mxu0 0.0
  %224 = vmatpush2.xpose.msra.mxu0 0.0
  %225 = vmatprep.subr.mxu0 0.0
  %226 = vmatpush2.xpose.msra.mxu0 0.0
  %227 = vmatprep.subr.mxu0 0.0
  %228 = vmatpush2.xpose.msra.mxu0 0.0
  %229 = vmatprep.subr.mxu0 0.0
  %230 = vmatpush2.xpose.msra.mxu0 0.0
  %231 = vmatprep.subr.mxu0 0.0
  %232 = vmatpush2.xpose.msra.mxu0 0.0
  %233 = vmatprep.subr.mxu0 0.0
  %234 = vmatpush2.xpose.msra.mxu0 0.0
  %235 = vmatprep.subr.mxu0 0.0
  %236 = vmatpush2.xpose.msra.mxu0 0.0
  %237 = vmatprep.mubr.f32.mxu0 0.0
  %238 = vmatmul.mubr.f32.gmra.mxu0 %v102
  %v239 = vpop.f32.mrf.mxu0
  %v240 = vadd.f32 %v63, %v239
  %v241 = vpop.f32.mrf.mxu0
  %242 = vmatprep.mubr.f32.mxu0 0.0
  %243 = vmatmul.mubr.f32.gmra.mxu0 %v105
  %v244 = vpop.f32.mrf.mxu0
  %v245 = vadd.f32 %v68, %v244
  %v246 = vpop.f32.mrf.mxu0
  %247 = vmatprep.mubr.f32.mxu0 0.0
  %248 = vmatmul.mubr.f32.gmra.mxu0 %v108
  %v249 = vpop.f32.mrf.mxu0
  %v250 = vadd.f32 %v73, %v249
  %v251 = vpop.f32.mrf.mxu0
  %252 = vmatprep.mubr.f32.mxu0 0.0
  %253 = vmatmul.mubr.f32.gmra.mxu0 %v111
  %v254 = vpop.f32.mrf.mxu0
  %v255 = vadd.f32 %v78, %v254
  %v256 = vpop.f32.mrf.mxu0
  %257 = vmatprep.mubr.f32.mxu0 0.0
  %258 = vmatmul.mubr.f32.gmra.mxu0 %v114
  %v259 = vpop.f32.mrf.mxu0
  %v260 = vadd.f32 %v83, %v259
  %v261 = vpop.f32.mrf.mxu0
  %262 = vmatprep.mubr.f32.mxu0 0.0
  %263 = vmatmul.mubr.f32.gmra.mxu0 %v117
  %v264 = vpop.f32.mrf.mxu0
  %v265 = vadd.f32 %v88, %v264
  %v266 = vpop.f32.mrf.mxu0
  %267 = vmatprep.mubr.f32.mxu0 0.0
  %268 = vmatmul.mubr.f32.gmra.mxu0 %v120
  %v269 = vpop.f32.mrf.mxu0
  %v270 = vadd.f32 %v93, %v269
  %v271 = vpop.f32.mrf.mxu0
  %272 = vmatprep.mubr.f32.mxu0 0.0
  %273 = vmatmul.mubr.f32.gmra.mxu0 %v123
  %v274 = vpop.f32.mrf.mxu0
  %v275 = vadd.f32 %v98, %v274
  %v276 = vpop.f32.mrf.mxu0
  %277 = vdwg.mxu0
  %v278 = vtanh.pop %v240
  %v279 = vtanh.pop %v245
  %v280 = vtanh.pop %v250
  %v281 = vtanh.pop %v255
  %v282 = vtanh.pop %v260
  %v283 = vtanh.pop %v265
  %v284 = vtanh.pop %v270
  %v285 = vtanh.pop %v275
  %v286 = vld [vmem:[%s3] sm:$0xff]
  %v287 = vld [vmem:[%s3 + $0x8] sm:$0xff]
  %v288 = vld [vmem:[%s3 + $0x10] sm:$0xff]
  %v289 = vld [vmem:[%s3 + $0x18] sm:$0xff]
  %v290 = vld [vmem:[%s3 + $0x20] sm:$0xff]
  %v291 = vld [vmem:[%s3 + $0x28] sm:$0xff]
  %v292 = vld [vmem:[%s3 + $0x30] sm:$0xff]
  %v293 = vld [vmem:[%s3 + $0x38] sm:$0xff]
  %v294 = vld [vmem:[%s3 + $0x40] sm:$0xff]
  %v295 = vld [vmem:[%s3 + $0x48] sm:$0xff]
  %v296 = vld [vmem:[%s3 + $0x50] sm:$0xff]
  %v297 = vld [vmem:[%s3 + $0x58] sm:$0xff]
  %v298 = vld [vmem:[%s3 + $0x60] sm:$0xff]
  %v299 = vld [vmem:[%s4] sm:$0xff]
  %v300 = vld [vmem:[%s4 + $0x8] sm:$0xff]
  %v301 = vld [vmem:[%s4 + $0x10] sm:$0xff]
  %v302 = vld [vmem:[%s4 + $0x18] sm:$0xff]
  %v303 = vld [vmem:[%s4 + $0x20] sm:$0xff]
  %v304 = vld [vmem:[%s4 + $0x28] sm:$0xff]
  %v305 = vld [vmem:[%s4 + $0x30] sm:$0xff]
  %v306 = vld [vmem:[%s4 + $0x38] sm:$0xff]
  %v307 = vld [vmem:[%s4 + $0x40] sm:$0xff]
  %v308 = vld [vmem:[%s4 + $0x48] sm:$0xff]
  %v309 = vld [vmem:[%s4 + $0x50] sm:$0xff]
  %v310 = vld [vmem:[%s4 + $0x58] sm:$0xff]
  %v311 = vld [vmem:[%s4 + $0x60] sm:$0xff]
  %313 = vset.pattern.permute.xlu0 0
  %314 = vperm.xlu0 %313, %v299
  %v315 = vpop.permute.xlu0 %314
  %318 = vset.pattern.permute.xlu0 0
  %319 = vperm.xlu0 %318, %v300
  %v320 = vpop.permute.xlu0 %319
  %323 = vset.pattern.permute.xlu0 0
  %324 = vperm.xlu0 %323, %v301
  %v325 = vpop.permute.xlu0 %324
  %328 = vset.pattern.permute.xlu0 0
  %329 = vperm.xlu0 %328, %v302
  %v330 = vpop.permute.xlu0 %329
  %333 = vset.pattern.permute.xlu0 0
  %334 = vperm.xlu0 %333, %v303
  %v335 = vpop.permute.xlu0 %334
  %338 = vset.pattern.permute.xlu0 0
  %339 = vperm.xlu0 %338, %v304
  %v340 = vpop.permute.xlu0 %339
  %343 = vset.pattern.permute.xlu0 0
  %344 = vperm.xlu0 %343, %v305
  %v345 = vpop.permute.xlu0 %344
  %348 = vset.pattern.permute.xlu0 0
  %349 = vperm.xlu0 %348, %v306
  %v350 = vpop.permute.xlu0 %349
  %353 = vset.pattern.permute.xlu0 0
  %354 = vperm.xlu0 %353, %v307
  %v355 = vpop.permute.xlu0 %354
  %358 = vset.pattern.permute.xlu0 0
  %359 = vperm.xlu0 %358, %v308
  %v360 = vpop.permute.xlu0 %359
  %363 = vset.pattern.permute.xlu0 0
  %364 = vperm.xlu0 %363, %v309
  %v365 = vpop.permute.xlu0 %364
  %368 = vset.pattern.permute.xlu0 0
  %369 = vperm.xlu0 %368, %v310
  %v370 = vpop.permute.xlu0 %369
  %373 = vset.pattern.permute.xlu0 0
  %374 = vperm.xlu0 %373, %v311
  %v375 = vpop.permute.xlu0 %374
  %vm377 = vcmask 523264
  %v379 = vsel %vm377, %v286, 0
  %v382 = vsel %vm377, %v287, 0
  %v385 = vsel %vm377, %v288, 0
  %v388 = vsel %vm377, %v289, 0
  %v391 = vsel %vm377, %v290, 0
  %v394 = vsel %vm377, %v291, 0
  %v397 = vsel %vm377, %v292, 0
  %v400 = vsel %vm377, %v293, 0
  %v403 = vsel %vm377, %v294, 0
  %v406 = vsel %vm377, %v295, 0
  %v409 = vsel %vm377, %v296, 0
  %v412 = vsel %vm377, %v297, 0
  %v415 = vsel %vm377, %v298, 0
  %417 = vmatprep.subr.mxu0 0.0
  %418 = vmatpush1.msra.mxu0 0.0
  %419 = vmatprep.subr.mxu0 0.0
  %420 = vmatpush1.msra.mxu0 0.0
  %421 = vmatprep.subr.mxu0 0.0
  %422 = vmatpush1.msra.mxu0 0.0
  %423 = vmatprep.subr.mxu0 0.0
  %424 = vmatpush1.msra.mxu0 0.0
  %425 = vmatprep.subr.mxu0 0.0
  %426 = vmatpush1.msra.mxu0 0.0
  %427 = vmatprep.subr.mxu0 0.0
  %428 = vmatpush1.msra.mxu0 0.0
  %429 = vmatprep.subr.mxu0 0.0
  %430 = vmatpush1.msra.mxu0 0.0
  %431 = vmatprep.subr.mxu0 0.0
  %432 = vmatpush1.msra.mxu0 0.0
  %433 = vmatprep.subr.mxu0 0.0
  %434 = vmatpush1.msra.mxu0 %v285
  %435 = vmatprep.subr.mxu0 0.0
  %436 = vmatpush1.msra.mxu0 %v284
  %437 = vmatprep.subr.mxu0 0.0
  %438 = vmatpush1.msra.mxu0 %v283
  %439 = vmatprep.subr.mxu0 0.0
  %440 = vmatpush1.msra.mxu0 %v282
  %441 = vmatprep.subr.mxu0 0.0
  %442 = vmatpush1.msra.mxu0 %v281
  %443 = vmatprep.subr.mxu0 0.0
  %444 = vmatpush1.msra.mxu0 %v280
  %445 = vmatprep.subr.mxu0 0.0
  %446 = vmatpush1.msra.mxu0 %v279
  %447 = vmatprep.subr.mxu0 0.0
  %448 = vmatpush1.msra.mxu0 %v278
  %449 = vmatprep.subr.mxu0 0.0
  %450 = vmatpush2.msra.mxu0 0.0
  %451 = vmatprep.subr.mxu0 0.0
  %452 = vmatpush2.msra.mxu0 0.0
  %453 = vmatprep.subr.mxu0 0.0
  %454 = vmatpush2.msra.mxu0 0.0
  %455 = vmatprep.subr.mxu0 0.0
  %456 = vmatpush2.msra.mxu0 0.0
  %457 = vmatprep.subr.mxu0 0.0
  %458 = vmatpush2.msra.mxu0 0.0
  %459 = vmatprep.subr.mxu0 0.0
  %460 = vmatpush2.msra.mxu0 0.0
  %461 = vmatprep.subr.mxu0 0.0
  %462 = vmatpush2.msra.mxu0 0.0
  %463 = vmatprep.subr.mxu0 0.0
  %464 = vmatpush2.msra.mxu0 0.0
  %465 = vmatprep.subr.mxu0 0.0
  %466 = vmatpush2.msra.mxu0 0.0
  %467 = vmatprep.subr.mxu0 0.0
  %468 = vmatpush2.msra.mxu0 0.0
  %469 = vmatprep.subr.mxu0 0.0
  %470 = vmatpush2.msra.mxu0 0.0
  %471 = vmatprep.subr.mxu0 0.0
  %472 = vmatpush2.msra.mxu0 0.0
  %473 = vmatprep.subr.mxu0 0.0
  %474 = vmatpush2.msra.mxu0 0.0
  %475 = vmatprep.subr.mxu0 0.0
  %476 = vmatpush2.msra.mxu0 0.0
  %477 = vmatprep.subr.mxu0 0.0
  %478 = vmatpush2.msra.mxu0 0.0
  %479 = vmatprep.subr.mxu0 0.0
  %480 = vmatpush2.msra.mxu0 0.0
  %481 = vmatprep.mubr.f32.mxu0 0.0
  %482 = vmatmul.mubr.f32.gmra.mxu0 %v379
  %v483 = vpop.f32.mrf.mxu0
  %v484 = vadd.f32 %v315, %v483
  %v485 = vpop.f32.mrf.mxu0
  %486 = vmatprep.mubr.f32.mxu0 0.0
  %487 = vmatmul.mubr.f32.gmra.mxu0 %v382
  %v488 = vpop.f32.mrf.mxu0
  %v489 = vadd.f32 %v320, %v488
  %v490 = vpop.f32.mrf.mxu0
  %491 = vmatprep.mubr.f32.mxu0 0.0
  %492 = vmatmul.mubr.f32.gmra.mxu0 %v385
  %v493 = vpop.f32.mrf.mxu0
  %v494 = vadd.f32 %v325, %v493
  %v495 = vpop.f32.mrf.mxu0
  %496 = vmatprep.mubr.f32.mxu0 0.0
  %497 = vmatmul.mubr.f32.gmra.mxu0 %v388
  %v498 = vpop.f32.mrf.mxu0
  %v499 = vadd.f32 %v330, %v498
  %v500 = vpop.f32.mrf.mxu0
  %501 = vmatprep.mubr.f32.mxu0 0.0
  %502 = vmatmul.mubr.f32.gmra.mxu0 %v391
  %v503 = vpop.f32.mrf.mxu0
  %v504 = vadd.f32 %v335, %v503
  %v505 = vpop.f32.mrf.mxu0
  %506 = vmatprep.mubr.f32.mxu0 0.0
  %507 = vmatmul.mubr.f32.gmra.mxu0 %v394
  %v508 = vpop.f32.mrf.mxu0
  %v509 = vadd.f32 %v340, %v508
  %v510 = vpop.f32.mrf.mxu0
  %511 = vmatprep.mubr.f32.mxu0 0.0
  %512 = vmatmul.mubr.f32.gmra.mxu0 %v397
  %v513 = vpop.f32.mrf.mxu0
  %v514 = vadd.f32 %v345, %v513
  %v515 = vpop.f32.mrf.mxu0
  %516 = vmatprep.mubr.f32.mxu0 0.0
  %517 = vmatmul.mubr.f32.gmra.mxu0 %v400
  %v518 = vpop.f32.mrf.mxu0
  %v519 = vadd.f32 %v350, %v518
  %v520 = vpop.f32.mrf.mxu0
  %521 = vmatprep.mubr.f32.mxu0 0.0
  %522 = vmatmul.mubr.f32.gmra.mxu0 %v403
  %v523 = vpop.f32.mrf.mxu0
  %v524 = vadd.f32 %v355, %v523
  %v525 = vpop.f32.mrf.mxu0
  %526 = vmatprep.mubr.f32.mxu0 0.0
  %527 = vmatmul.mubr.f32.gmra.mxu0 %v406
  %v528 = vpop.f32.mrf.mxu0
  %v529 = vadd.f32 %v360, %v528
  %v530 = vpop.f32.mrf.mxu0
  %531 = vmatprep.mubr.f32.mxu0 0.0
  %532 = vmatmul.mubr.f32.gmra.mxu0 %v409
  %v533 = vpop.f32.mrf.mxu0
  %v534 = vadd.f32 %v365, %v533
  %v535 = vpop.f32.mrf.mxu0
  %536 = vmatprep.mubr.f32.mxu0 0.0
  %537 = vmatmul.mubr.f32.gmra.mxu0 %v412
  %v538 = vpop.f32.mrf.mxu0
  %v539 = vadd.f32 %v370, %v538
  %v540 = vpop.f32.mrf.mxu0
  %541 = vmatprep.mubr.f32.mxu0 0.0
  %542 = vmatmul.mubr.f32.gmra.mxu0 %v415
  %v543 = vpop.f32.mrf.mxu0
  %v544 = vadd.f32 %v375, %v543
  %v545 = vpop.f32.mrf.mxu0
  %546 = vdwg.mxu0
  %v547 = vtanh.pop %v484
  %v548 = vtanh.pop %v489
  %v549 = vtanh.pop %v494
  %v550 = vtanh.pop %v499
  %v551 = vtanh.pop %v504
  %v552 = vtanh.pop %v509
  %v553 = vtanh.pop %v514
  %v554 = vtanh.pop %v519
  %v555 = vtanh.pop %v524
  %v556 = vtanh.pop %v529
  %v557 = vtanh.pop %v534
  %v558 = vtanh.pop %v539
  %v559 = vtanh.pop %v544
  %v560 = vld [vmem:[%s5] sm:$0xff]
  %v561 = vld [vmem:[%s5 + $0x8] sm:$0xff]
  %v562 = vld [vmem:[%s5 + $0x10] sm:$0xff]
  %v563 = vld [vmem:[%s5 + $0x18] sm:$0xff]
  %v564 = vld [vmem:[%s5 + $0x20] sm:$0xff]
  %v565 = vld [vmem:[%s5 + $0x28] sm:$0xff]
  %v566 = vld [vmem:[%s5 + $0x30] sm:$0xff]
  %v567 = vld [vmem:[%s5 + $0x38] sm:$0xff]
  %v568 = vld [vmem:[%s5 + $0x40] sm:$0xff]
  %v569 = vld [vmem:[%s5 + $0x48] sm:$0xff]
  %v570 = vld [vmem:[%s5 + $0x50] sm:$0xff]
  %v571 = vld [vmem:[%s5 + $0x58] sm:$0xff]
  %v572 = vld [vmem:[%s5 + $0x60] sm:$0xff]
  %574 = vset.pattern.permute.xlu0 0
  %575 = vperm.xlu0 %574, %v560
  %v576 = vpop.permute.xlu0 %575
  %579 = vset.pattern.permute.xlu0 0
  %580 = vperm.xlu0 %579, %v561
  %v581 = vpop.permute.xlu0 %580
  %584 = vset.pattern.permute.xlu0 0
  %585 = vperm.xlu0 %584, %v562
  %v586 = vpop.permute.xlu0 %585
  %589 = vset.pattern.permute.xlu0 0
  %590 = vperm.xlu0 %589, %v563
  %v591 = vpop.permute.xlu0 %590
  %594 = vset.pattern.permute.xlu0 0
  %595 = vperm.xlu0 %594, %v564
  %v596 = vpop.permute.xlu0 %595
  %599 = vset.pattern.permute.xlu0 0
  %600 = vperm.xlu0 %599, %v565
  %v601 = vpop.permute.xlu0 %600
  %604 = vset.pattern.permute.xlu0 0
  %605 = vperm.xlu0 %604, %v566
  %v606 = vpop.permute.xlu0 %605
  %609 = vset.pattern.permute.xlu0 0
  %610 = vperm.xlu0 %609, %v567
  %v611 = vpop.permute.xlu0 %610
  %614 = vset.pattern.permute.xlu0 0
  %615 = vperm.xlu0 %614, %v568
  %v616 = vpop.permute.xlu0 %615
  %619 = vset.pattern.permute.xlu0 0
  %620 = vperm.xlu0 %619, %v569
  %v621 = vpop.permute.xlu0 %620
  %624 = vset.pattern.permute.xlu0 0
  %625 = vperm.xlu0 %624, %v570
  %v626 = vpop.permute.xlu0 %625
  %629 = vset.pattern.permute.xlu0 0
  %630 = vperm.xlu0 %629, %v571
  %v631 = vpop.permute.xlu0 %630
  %634 = vset.pattern.permute.xlu0 0
  %635 = vperm.xlu0 %634, %v572
  %v636 = vpop.permute.xlu0 %635
  %v638 = vmul.f32 %v547, %v576
  %v639 = vmul.f32 %v548, %v581
  %v640 = vmul.f32 %v549, %v586
  %v641 = vmul.f32 %v550, %v591
  %v642 = vmul.f32 %v551, %v596
  %v643 = vmul.f32 %v552, %v601
  %v644 = vmul.f32 %v553, %v606
  %v645 = vmul.f32 %v554, %v611
  %v646 = vmul.f32 %v555, %v616
  %v647 = vmul.f32 %v556, %v621
  %v648 = vmul.f32 %v557, %v626
  %v649 = vmul.f32 %v558, %v631
  %v650 = vmul.f32 %v559, %v636
  %v651 = vadd.f32 %v638, %v639
  %v652 = vadd.f32 %v651, %v640
  %v653 = vadd.f32 %v652, %v641
  %v654 = vadd.f32 %v653, %v642
  %v655 = vadd.f32 %v654, %v643
  %v656 = vadd.f32 %v655, %v644
  %v657 = vadd.f32 %v656, %v645
  %v658 = vadd.f32 %v657, %v646
  %v659 = vadd.f32 %v658, %v647
  %v660 = vadd.f32 %v659, %v648
  %v661 = vadd.f32 %v660, %v649
  %v662 = vadd.f32 %v661, %v650
  %v663 = vrot.slane %v662, 4
  %v664 = vadd.f32 %v662, %v663
  %v665 = vrot.slane %v664, 2
  %v666 = vadd.f32 %v664, %v665
  %v667 = vrot.slane %v666, 1
  %v668 = vadd.f32 %v666, %v667
  %v669 = vld [vmem:[#allocation2] sm:$0x1]
  %671 = vset.pattern.permute.xlu0 0
  %672 = vperm.xlu0 %671, %v669
  %v673 = vpop.permute.xlu0 %672
  %v675 = vlaneseq
  %v676 = vshrl.u32 %v675, 7
  %v677 = vsub.s32 0, %v676
  %v678 = vrot.slane %v673, %v677
  %v679 = vadd.f32 %v668, %v678
  %v680 = vmax.f32 %v679, 0.0
  %681 = vst [vmem:[%s7] sm:$0x1] %v680
  // Predicated region
  $region30: #{neural_network_forward.1} parent=0 // pred_check
    _
  $region31: #{neural_network_forward.1} parent=0 // pred_check_branch
    %683 = sbr.rel (0) target = $region33
  $region32: #{neural_network_forward.1} parent=0 // pred_region
    _
  $region33: #{neural_network_forward.1} parent=0 // pred_fallthru
    _
  // Predicated region
  $region34: #{neural_network_forward.1} parent=0 // pred_check
    _
  $region35: #{neural_network_forward.1} parent=0 // pred_check_branch
    %685 = sbr.rel (0) target = $region37
  $region36: #{neural_network_forward.1} parent=0 // pred_region
    _
  $region37: #{neural_network_forward.1} parent=0 // pred_fallthru
    _

</llo_original>
